<compile_context>
chip_gen: v6e
topology: v6e:2x2x1
jax: 0.10.0
libtpu: 0.0.40
codegen_flags: <defaults>
</compile_context>

<pallas_src>
import functools

import jax
import jax.numpy as jnp
from jax import lax
from jax.experimental import pallas as pl
from jax.experimental.pallas import tpu as pltpu

PAIRWISE_EPS = 1e-6  # torch.nn.functional.pairwise_distance default eps

_VMEM_BLOCK_BUDGET = 44 * 1024 * 1024  # double-buffered streamed-block budget
_VMEM_LIMIT_BYTES = 56 * 1024 * 1024   # scoped VMEM limit (<= 64 MiB on v7x)


def _triplet_margin_kernel(needs_mask, n_ref, margin_ref, x_ref, out_ref, acc_ref):
    """One grid step per (split, row-block) of triplets.

    x_ref block is (3, tm, E): [anchor rows, positive rows, negative rows].
    Per step: in-vreg upcast, elementwise diff + square, lane-reduce to per-row
    L2 distances, hinge, accumulate per-row partials into a (tm, 1) VMEM
    scratch. Finalize (last inner step) reduces the scratch to a scalar and
    broadcasts it into this split's output block.
    """
    c = pl.program_id(0)                 # split index (TensorCore on v7x)
    i = pl.program_id(1)                 # row-block index within the split
    inner_steps = pl.num_programs(1)
    tm = x_ref.shape[1]

    @pl.when(i == 0)
    def _init():
        acc_ref[...] = jnp.zeros_like(acc_ref)

    n_valid = n_ref[0]
    margin = margin_ref[0]

    a = x_ref[0].astype(jnp.float32)     # (tm, E), upcast in registers
    p = x_ref[1].astype(jnp.float32)
    ng = x_ref[2].astype(jnp.float32)

    dp = a - p + PAIRWISE_EPS
    dn = a - ng + PAIRWISE_EPS

    if needs_mask:
        # Global (unclamped) row index; rows >= n_valid are the ragged tail of
        # the edge block or a clamped duplicate block -> zero them BEFORE the
        # square/sqrt so uninitialized data can never generate NaN/Inf.
        blk = c * inner_steps + i
        row = blk * tm + lax.broadcasted_iota(jnp.int32, (tm, 1), 0)
        valid = row < n_valid
        dp = jnp.where(valid, dp, 0.0)
        dn = jnp.where(valid, dn, 0.0)

    d_ap = jnp.sqrt(jnp.sum(dp * dp, axis=1, keepdims=True))   # (tm, 1)
    d_an = jnp.sqrt(jnp.sum(dn * dn, axis=1, keepdims=True))   # (tm, 1)
    hinge = jnp.maximum(d_ap - d_an + margin, 0.0)
    if needs_mask:
        hinge = jnp.where(valid, hinge, 0.0)

    acc_ref[...] += hinge

    @pl.when(i == inner_steps - 1)
    def _finalize():
        out_ref[...] = jnp.full(out_ref.shape, jnp.sum(acc_ref[...]),
                                dtype=jnp.float32)


def triplet_loss_offline_native(embeddings, labels=None, margin=1.0, *,
                                block_rows=None, num_splits=None):
    """Mirrors TripletLossOfflineNative.forward: returns (loss, [-1], [-1]).

    block_rows / num_splits are optional overrides (mainly for testing the
    multi-block / multi-split code paths at small shapes).
    """
    del labels  # unused by the offline-native module
    B, E = embeddings.shape
    n = B // 3
    if n == 0:
        raise ValueError("TripletLossOfflineNative needs at least 3 embeddings")
    # Guard B % 3 != 0 (torch would error on mismatched shapes anyway); the
    # common case B == 3n passes embeddings through untouched.
    x = embeddings if B == 3 * n else embeddings[: 3 * n]
    x = x.reshape(3, n, E)  # contiguous bitcast view: a / p / n thirds stacked

    itemsize = jnp.dtype(x.dtype).itemsize

    # ---- row-tile selection: biggest tile that fits the double-buffered
    # ---- VMEM budget (3 thirds x 2 buffers x tm x E), capped at 1024 rows.
    if block_rows is None:
        tm = _VMEM_BLOCK_BUDGET // (2 * 3 * E * itemsize)
        tm = max(8, min(1024, (int(tm) // 8) * 8))
    else:
        tm = max(8, (int(block_rows) // 8) * 8)
    if n <= tm:
        tm = n  # single row-block; block dim == full dim is always legal

    total_blocks = -(-n // tm)

    # ---- split the row-blocks across (up to) 2 TensorCores (v7x megacore);
    # ---- a single "parallel" axis of size 1 on v5e/v6e costs nothing.
    if num_splits is None:
        num_splits = 2 if total_blocks >= 2 else 1
    num_splits = max(1, min(int(num_splits), total_blocks))
    inner_steps = -(-total_blocks // num_splits)

    # Mask only needed if the edge block is ragged or a split has a clamped
    # duplicate block (statically known -> dead code otherwise).
    needs_mask = (total_blocks * tm != n) or (num_splits * inner_steps != total_blocks)

    def x_index_map(c, i, n_sref, m_sref):
        # Clamp so an over-hanging split step re-reads the last real block
        # (its rows are fully masked in-kernel -> contributes zero).
        return (0, jnp.minimum(c * inner_steps + i, total_blocks - 1), 0)

    def out_index_map(c, i, n_sref, m_sref):
        return (c, 0, 0)

    kernel = functools.partial(_triplet_margin_kernel, needs_mask)

    partials = pl.pallas_call(
        kernel,
        out_shape=jax.ShapeDtypeStruct((num_splits, 8, 128), jnp.float32),
        grid_spec=pltpu.PrefetchScalarGridSpec(
            num_scalar_prefetch=2,                       # n_valid, margin
            grid=(num_splits, inner_steps),
            in_specs=[pl.BlockSpec((3, tm, E), x_index_map)],
            out_specs=pl.BlockSpec((1, 8, 128), out_index_map),
            scratch_shapes=[pltpu.VMEM((tm, 1), jnp.float32)],
        ),
        compiler_params=pltpu.CompilerParams(
            dimension_semantics=("parallel", "arbitrary"),
            vmem_limit_bytes=_VMEM_LIMIT_BYTES,
        ),
    )(
        jnp.array([n], dtype=jnp.int32),
        jnp.array([margin], dtype=jnp.float32),
        x,
    )

    loss = jnp.sum(partials[:, 0, 0]) / jnp.float32(n)
    no_value = jnp.array([-1.0], dtype=jnp.float32)
    return loss, no_value, no_value


def _reference(embeddings, margin=1.0):
    """Pure-JAX mirror of nn.TripletMarginLoss(margin) on the three thirds."""
    n = embeddings.shape[0] // 3
    emb = embeddings.astype(jnp.float32)
    a = emb[:n]
    p = emb[n:2 * n]
    ng = emb[2 * n:3 * n]
    d_ap = jnp.sqrt(jnp.sum((a - p + PAIRWISE_EPS) ** 2, axis=-1))
    d_an = jnp.sqrt(jnp.sum((a - ng + PAIRWISE_EPS) ** 2, axis=-1))
    return jnp.mean(jnp.maximum(d_ap - d_an + margin, 0.0))


if __name__ == "__main__":
    key = jax.random.PRNGKey(0)
    k1, k2 = jax.random.split(key)

    # Case 1: tiny f32 batch -> single block, single split (zero mask overhead).
    n_triplets, E = 4, 32
    B = 3 * n_triplets
    emb = jax.random.normal(k1, (B, E), dtype=jnp.float32)
    labels = jnp.arange(B, dtype=jnp.int32)  # unused, API parity only
    loss, pos_dist, neg_dist = triplet_loss_offline_native(emb, labels, margin=1.0)
    jax.block_until_ready((loss, pos_dist, neg_dist))
    r_loss = _reference(emb, 1.0)
    assert jnp.allclose(loss, r_loss, rtol=1e-5, atol=1e-6), (loss, r_loss)
    assert jnp.allclose(pos_dist, -1.0) and jnp.allclose(neg_dist, -1.0)

    # Case 2: bf16 input, forced small row tile + 2-way split with a ragged
    # edge block -> exercises in-kernel upcast, block clamping and row masking.
    n_triplets2, E2 = 35, 40
    emb2 = jax.random.normal(k2, (3 * n_triplets2, E2),
                             dtype=jnp.float32).astype(jnp.bfloat16)
    loss2, _, _ = triplet_loss_offline_native(emb2, None, margin=0.5,
                                              block_rows=8, num_splits=2)
    jax.block_until_ready(loss2)
    r_loss2 = _reference(emb2, 0.5)
    assert jnp.allclose(loss2, r_loss2, rtol=1e-4, atol=1e-5), (loss2, r_loss2)

    print("KERNEL_OK")
</pallas_src>

<mosaic_0001>
module attributes {stable_mosaic.version = 11 : i64} {
  func.func @_triplet_margin_kernel(%arg0: i32, %arg1: i32, %arg2: memref<1xi32, #tpu.memory_space<smem>>, %arg3: memref<1xf32, #tpu.memory_space<smem>>, %arg4: memref<3x4x32xf32, #tpu.memory_space<vmem>>, %arg5: memref<1x8x128xf32, #tpu.memory_space<vmem>>, %arg6: memref<4x1xf32, #tpu.memory_space<vmem>>) attributes {dimension_semantics = [#tpu.dimension_semantics<parallel>, #tpu.dimension_semantics<arbitrary>], iteration_bounds = array<i64: 1, 1>, scalar_prefetch = 2 : i64, scratch_operands = 1 : i64, tpu.core_type = #tpu.core_type<tc>, window_params = [{transform_indices = @transform_0, window_bounds = array<i64: 3, 4, 32>}, {transform_indices = @transform_1, window_bounds = array<i64: 1, 8, 128>}]} {
    %c0_i32 = arith.constant 0 : i32
    %0 = arith.cmpi eq, %arg1, %c0_i32 : i32
    %1 = arith.extui %0 : i1 to i32
    %c0_i32_0 = arith.constant 0 : i32
    %2 = arith.cmpi ne, %1, %c0_i32_0 : i32
    scf.if %2 {
      %cst_18 = arith.constant 0.000000e+00 : f32
      %35 = vector.broadcast %cst_18 : f32 to vector<4x1xf32>
      %c0_19 = arith.constant 0 : index
      %c0_20 = arith.constant 0 : index
      %36 = vector.load %arg6[%c0_19, %c0_20] : memref<4x1xf32, #tpu.memory_space<vmem>>, vector<4x1xf32>
      tpu.vector_store %arg6[%c0_19, %c0_20], %35 {strides = array<i32>} : memref<4x1xf32, #tpu.memory_space<vmem>>, vector<4x1xf32>,
    } else {
    }
    %c0 = arith.constant 0 : index
    %3 = memref.load %arg3[%c0] : memref<1xf32, #tpu.memory_space<smem>>
    %c0_1 = arith.constant 0 : index
    %c0_2 = arith.constant 0 : index
    %c0_3 = arith.constant 0 : index
    %4 = vector.load %arg4[%c0_1, %c0_2, %c0_3] : memref<3x4x32xf32, #tpu.memory_space<vmem>>, vector<1x4x32xf32>
    %5 = vector.shape_cast %4 : vector<1x4x32xf32> to vector<4x32xf32>
    %c1 = arith.constant 1 : index
    %c0_4 = arith.constant 0 : index
    %c0_5 = arith.constant 0 : index
    %6 = vector.load %arg4[%c1, %c0_4, %c0_5] : memref<3x4x32xf32, #tpu.memory_space<vmem>>, vector<1x4x32xf32>
    %7 = vector.shape_cast %6 : vector<1x4x32xf32> to vector<4x32xf32>
    %c2 = arith.constant 2 : index
    %c0_6 = arith.constant 0 : index
    %c0_7 = arith.constant 0 : index
    %8 = vector.load %arg4[%c2, %c0_6, %c0_7] : memref<3x4x32xf32, #tpu.memory_space<vmem>>, vector<1x4x32xf32>
    %9 = vector.shape_cast %8 : vector<1x4x32xf32> to vector<4x32xf32>
    %10 = arith.subf %5, %7 : vector<4x32xf32>
    %cst = arith.constant 9.99999997E-7 : f32
    %11 = vector.broadcast %cst : f32 to vector<4x32xf32>
    %12 = arith.addf %10, %11 : vector<4x32xf32>
    %13 = arith.subf %5, %9 : vector<4x32xf32>
    %cst_8 = arith.constant 9.99999997E-7 : f32
    %14 = vector.broadcast %cst_8 : f32 to vector<4x32xf32>
    %15 = arith.addf %13, %14 : vector<4x32xf32>
    %16 = arith.mulf %12, %12 : vector<4x32xf32>
    %cst_9 = arith.constant dense<0.000000e+00> : vector<4xf32>
    %17 = vector.multi_reduction <add>, %16, %cst_9 [1] : vector<4x32xf32> to vector<4xf32>
    %18 = vector.shape_cast %17 : vector<4xf32> to vector<4x1xf32>
    %19 = math.sqrt %18 : vector<4x1xf32>
    %20 = arith.mulf %15, %15 : vector<4x32xf32>
    %cst_10 = arith.constant dense<0.000000e+00> : vector<4xf32>
    %21 = vector.multi_reduction <add>, %20, %cst_10 [1] : vector<4x32xf32> to vector<4xf32>
    %22 = vector.shape_cast %21 : vector<4xf32> to vector<4x1xf32>
    %23 = math.sqrt %22 : vector<4x1xf32>
    %24 = arith.subf %19, %23 : vector<4x1xf32>
    %25 = vector.broadcast %3 : f32 to vector<4x1xf32>
    %26 = arith.addf %24, %25 : vector<4x1xf32>
    %cst_11 = arith.constant 0.000000e+00 : f32
    %27 = vector.broadcast %cst_11 : f32 to vector<4x1xf32>
    %28 = arith.maximumf %26, %27 : vector<4x1xf32>
    %c0_12 = arith.constant 0 : index
    %c0_13 = arith.constant 0 : index
    %29 = vector.load %arg6[%c0_12, %c0_13] : memref<4x1xf32, #tpu.memory_space<vmem>>, vector<4x1xf32>
    %30 = arith.addf %29, %28 : vector<4x1xf32>
    %c0_14 = arith.constant 0 : index
    %c0_15 = arith.constant 0 : index
    %31 = vector.load %arg6[%c0_14, %c0_15] : memref<4x1xf32, #tpu.memory_space<vmem>>, vector<4x1xf32>
    tpu.vector_store %arg6[%c0_14, %c0_15], %30 {strides = array<i32>} : memref<4x1xf32, #tpu.memory_space<vmem>>, vector<4x1xf32>,
    %c0_i32_16 = arith.constant 0 : i32
    %32 = arith.cmpi eq, %arg1, %c0_i32_16 : i32
    %33 = arith.extui %32 : i1 to i32
    %c0_i32_17 = arith.constant 0 : i32
    %34 = arith.cmpi ne, %33, %c0_i32_17 : i32
    scf.if %34 {
      %c0_18 = arith.constant 0 : index
      %c0_19 = arith.constant 0 : index
      %35 = vector.load %arg6[%c0_18, %c0_19] : memref<4x1xf32, #tpu.memory_space<vmem>>, vector<4x1xf32>
      %36 = vector.shape_cast %35 : vector<4x1xf32> to vector<1x4x1xf32>
      %cst_20 = arith.constant dense<0.000000e+00> : vector<1xf32>
      %37 = vector.multi_reduction <add>, %36, %cst_20 [1, 2] : vector<1x4x1xf32> to vector<1xf32>
      %38 = vector.shape_cast %37 : vector<1xf32> to vector<1x1x1xf32>
      %39 = vector.extract %38[0, 0, 0] : f32 from vector<1x1x1xf32>
      %40 = vector.broadcast %39 : f32 to vector<1x8x128xf32>
      %c0_21 = arith.constant 0 : index
      %c0_22 = arith.constant 0 : index
      %c0_23 = arith.constant 0 : index
      %41 = vector.load %arg5[%c0_21, %c0_22, %c0_23] : memref<1x8x128xf32, #tpu.memory_space<vmem>>, vector<1x8x128xf32>
      tpu.vector_store %arg5[%c0_21, %c0_22, %c0_23], %40 {strides = array<i32>} : memref<1x8x128xf32, #tpu.memory_space<vmem>>, vector<1x8x128xf32>,
    } else {
    }
    return
  }
  func.func @transform_0(%arg0: i32, %arg1: i32, %arg2: memref<1xi32, #tpu.memory_space<smem>>, %arg3: memref<1xf32, #tpu.memory_space<smem>>) -> (i32, i32, i32) {
    %c1_i32 = arith.constant 1 : i32
    %0 = arith.muli %arg0, %c1_i32 : i32
    %1 = arith.addi %0, %arg1 : i32
    %c0_i32 = arith.constant 0 : i32
    %2 = arith.minsi %1, %c0_i32 : i32
    %c0_i32_0 = arith.constant 0 : i32
    %c0_i32_1 = arith.constant 0 : i32
    %c0_i32_2 = arith.constant 0 : i32
    return %c0_i32_0, %2, %c0_i32_1 : i32, i32, i32
  }
  func.func @transform_1(%arg0: i32, %arg1: i32, %arg2: memref<1xi32, #tpu.memory_space<smem>>, %arg3: memref<1xf32, #tpu.memory_space<smem>>) -> (i32, i32, i32) {
    %c0_i32 = arith.constant 0 : i32
    %c0_i32_0 = arith.constant 0 : i32
    %c0_i32_1 = arith.constant 0 : i32
    return %arg0, %c0_i32, %c0_i32_0 : i32, i32, i32
  }
}

</mosaic_0001>

<llo_original>
// kernel: tpu_custom_call.1
$region0: #{tpu_custom_call.1}
  #allocation0 [shape = 'u32[]', space=smem, size = 0x4, offset = 0x4, fixed_abs, tag = 'smem constant byte address 0x4 - core index']
  #allocation1 [shape = 'u32[144,128]{1,0:T(1,128)}', space=vmem, size = 0x12000, scoped, tag = 'internal scratch']
  #allocation2 [shape = 'f32[4,1]{1,0:T(4,128)}', space=vmem, size = 0x800, scoped, tag = 'scratch operand']
  #allocation3 [shape = 's32[1]{0}', space=sflag, size = 0x4, scoped, tag = 'scoped memory for tpu_custom_call.1']
  #allocation4 [shape = 's32[1]{0:T(128)S(6)}', space=smem, size = 0x200, scoped, tag = 'prefetched SMEM operand 0']
  #allocation5 [shape = 'f32[1]{0:T(128)S(6)}', space=smem, size = 0x200, scoped, tag = 'prefetched SMEM operand 1']
  %s0 = inlined_call_operand.<no memory space> [shape: s32[1], index: 0, kind: input, shape index: {}]
  %s1 = inlined_call_operand.<no memory space> [shape: f32[1], index: 1, kind: input, shape index: {}]
  %s2 = inlined_call_operand.hbm [shape: f32[3,4,32], index: 2, kind: input, shape index: {}]
  %s3 = inlined_call_operand.hbm [shape: f32[1,8,128], index: 3, kind: output, shape index: {}]
  %s4 = sld [smem:[#allocation0]]
  $region26: #{tpu_custom_call.1} parent=0
    _
  %s6 = ssub.s32 1, %s4
  %s7 = scalar_select 0, %s6, %s4
  %8 = sst [smem:[#allocation4]] %s0
  %9 = sst [smem:[#allocation5]] %s1
  $region1: #{tpu_custom_call.1} parent=0
    #allocation6 [shape = 'u8[6144]{0}', space=vmem, size = 0x1800, scoped, tag = 'input window, operand 2, single buffered']
    #allocation7 [shape = 's32[1]{0}', space=sflag, size = 0x4, scoped, tag = 'scoped memory for tpu_custom_call.1']
    #allocation8 [shape = 's32[1]{0}', space=sflag, size = 0x4, scoped, tag = 'scoped memory for tpu_custom_call.1']
    #allocation9 [shape = 'u8[4096]{0}', space=vmem, size = 0x1000, scoped, tag = 'output window, operand 0, single buffered']
    %10 = vsyncpa [#allocation7], 0
    %11 = vsyncpa [#allocation8], 0
    // Predicated region
    $region2: #{tpu_custom_call.1} parent=1 // pred_check
      _
    $region3: #{tpu_custom_call.1} parent=1 // pred_check_branch
      %13 = sbr.rel (0) target = $region5
    $region4: #{tpu_custom_call.1} parent=1 // pred_region
      %s14 = sadd.s32 0, 0
      %p15 = scmp.lt.s32.totalorder %s14, 0
      %s16 = scalar_select %p15, %s14, 0
      %s18 = ssub.s32 192, 192
      %19 = vsyncadd [#allocation7], %s18
      %s20 = smul.addr %s16, 64
      %s21 = scalar_lea.hbm %s2, %s20
      %s22 = sshll.u32 [#allocation6], 4
      %s23 = int_to_ptr.vmem [resolvable:$true] %s22
      %28 = dma.hbm_to_vmem [thread:$0]  %s21, 192, %s23, [#allocation7], 64, 64, 4
    $region5: #{tpu_custom_call.1} parent=1 // pred_fallthru
      _
    // Predicated region
    $region6: #{tpu_custom_call.1} parent=1 // pred_check
      _
    $region7: #{tpu_custom_call.1} parent=1 // pred_check_branch
      %30 = sbr.rel (0) target = $region9
    $region8: #{tpu_custom_call.1} parent=1 // pred_region
      %31 = dma.done [#allocation7], 192
    $region9: #{tpu_custom_call.1} parent=1 // pred_fallthru
      _
    %s32 = sadd.s32 0, 0
    %p33 = scmp.lt.s32.totalorder %s32, 0
    %s34 = scalar_select %p33, %s32, 0
    %p35 = scmp.eq.s32.totalorder 0, 0
    // Predicated region
    $region10: #{tpu_custom_call.1} parent=1 // pred_check
      %p36 = pneg %p35
    $region11: #{tpu_custom_call.1} parent=1 // pred_check_branch
      %38 = sbr.rel (%p36) target = $region13
    $region12: #{tpu_custom_call.1} parent=1 // pred_region
      %vm39 = vcmask 3072
      %40 = vst.msk [vmem:[#allocation2] sm:$0xf] %vm39, 0.0
    $region13: #{tpu_custom_call.1} parent=1 // pred_fallthru
      _
    %s41 = sld [smem:[#allocation5]]
    %v42 = vld [vmem:[#allocation6] sm:$0xf]
    %s43 = scalar_lea.vmem [#allocation6], 4
    %v44 = vld [vmem:[%s43] sm:$0xf]
    %s45 = scalar_lea.vmem [#allocation6], 8
    %v46 = vld [vmem:[%s45] sm:$0xf]
    %v47 = vsub.f32 %v42, %v44
    %v48 = vadd.f32 %v47, 1e-06
    %v49 = vsub.f32 %v42, %v46
    %v50 = vadd.f32 %v49, 1e-06
    %v51 = vmul.f32 %v48, %v48
    %vm52 = vcmask 257024
    %v53 = vsel %vm52, %v51, 0.0
    %54 = vadd.xlane.f32.xlu0 %v53
    %v55 = vpop.xlane.xlu0 %54
    %v56 = vrsqrt.pop %v55
    %v57 = vmul.f32 %v55, %v56
    %vm58 = vcmp.eq.f32.partialorder %v55, inf
    %v59 = vsel %vm58, %v55, %v57
    %vm60 = vcmp.eq.f32.partialorder %v55, 0.0
    %v61 = vand.u32 %v55, 2147483648
    %v62 = vsel %vm60, %v61, %v59
    %v63 = vmul.f32 %v50, %v50
    %v64 = vsel %vm52, %v63, 0.0
    %65 = vadd.xlane.f32.xlu0 %v64
    %v66 = vpop.xlane.xlu0 %65
    %v67 = vrsqrt.pop %v66
    %v68 = vmul.f32 %v66, %v67
    %vm69 = vcmp.eq.f32.partialorder %v66, inf
    %v70 = vsel %vm69, %v66, %v68
    %vm71 = vcmp.eq.f32.partialorder %v66, 0.0
    %v72 = vand.u32 %v66, 2147483648
    %v73 = vsel %vm71, %v72, %v70
    %v74 = vsub.f32 %v62, %v73
    %v75 = vstv %s41
    %v76 = vadd.f32 %v74, %v75
    %v77 = vmax.f32 %v76, 0.0
    %v78 = vld [vmem:[#allocation2] sm:$0xf]
    %v79 = vadd.f32 %v78, %v77
    %vm80 = vcmask 3072
    %81 = vst.msk [vmem:[#allocation2] sm:$0xf] %vm80, %v79
    // Predicated region
    $region14: #{tpu_custom_call.1} parent=1 // pred_check
      %p82 = pneg %p35
    $region15: #{tpu_custom_call.1} parent=1 // pred_check_branch
      %84 = sbr.rel (%p82) target = $region17
    $region16: #{tpu_custom_call.1} parent=1 // pred_region
      %v85 = vld [vmem:[#allocation2] sm:$0xf]
      %v86 = vsel %vm80, %v85, 0.0
      %87 = vadd.xlane.f32.xlu0 %v86
      %v88 = vpop.xlane.xlu0 %87
      %v89 = vrot.slane %v88, 4
      %v90 = vadd.f32 %v88, %v89
      %v91 = vrot.slane %v90, 2
      %v92 = vadd.f32 %v90, %v91
      %v93 = vrot.slane %v92, 1
      %v94 = vadd.f32 %v92, %v93
      %s95 = vtos %v94
      %v96 = vstv %s95
      %97 = vst [vmem:[#allocation9] sm:$0xff] %v96
    $region17: #{tpu_custom_call.1} parent=1 // pred_fallthru
      _
    // Predicated region
    $region18: #{tpu_custom_call.1} parent=1 // pred_check
      _
    $region19: #{tpu_custom_call.1} parent=1 // pred_check_branch
      %99 = sbr.rel (0) target = $region21
    $region20: #{tpu_custom_call.1} parent=1 // pred_region
      %s101 = ssub.s32 128, 128
      %102 = vsyncadd [#allocation8], %s101
      %s104 = sshll.u32 [#allocation9], 4
      %s105 = int_to_ptr.vmem [resolvable:$true] %s104
      %107 = dma.vmem_to_hbm [thread:$0]  %s105, 128, %s3, [#allocation8]
    $region21: #{tpu_custom_call.1} parent=1 // pred_fallthru
      _
    // Predicated region
    $region22: #{tpu_custom_call.1} parent=1 // pred_check
      _
    $region23: #{tpu_custom_call.1} parent=1 // pred_check_branch
      %109 = sbr.rel (0) target = $region25
    $region24: #{tpu_custom_call.1} parent=1 // pred_region
      %110 = dma.done [#allocation8], 128
    $region25: #{tpu_custom_call.1} parent=1 // pred_fallthru
      _
    %111 = vsyncpa [#allocation7], 1
    %112 = vsyncpa [#allocation8], 1

</llo_original>
